<compile_context>
chip_gen: v5e
topology: v5e:2x2
jax: 0.10.0
libtpu: 0.0.40
codegen_flags: <defaults>
</compile_context>

<pallas_src>
import jax
import jax.numpy as jnp
from jax.experimental import pallas as pl
from jax.experimental.pallas import tpu as pltpu


# ----------------------------------------------------------------------------- kernel

def _rnn_seq_kernel(x_ref, h0_ref, wx_ref, wh_ref, b_ref,     # inputs
                    out_ref, hfin_ref,                         # outputs
                    h_scr):                                    # VMEM scratch (carried h)
    t = pl.program_id(1)
    T = pl.num_programs(1)
    H = hfin_ref.shape[-1]                                     # static

    # Initialize the carried hidden state once per batch block.
    @pl.when(t == 0)
    def _():
        h_scr[...] = h0_ref[...]

    x = x_ref[0]                                               # (bb, I)   compute dtype
    h_prev = h_scr[...].astype(x.dtype)                        # recurrence kept in f32

    # Fused i2h+i2o matmul, split over x / h instead of concatenating:
    #   z = [x | h] @ [W_i2h | W_i2o] + [b_i2h | b_i2o]        -> (bb, H+O) in f32
    z = (jnp.dot(x, wx_ref[...], preferred_element_type=jnp.float32)
         + jnp.dot(h_prev, wh_ref[...], preferred_element_type=jnp.float32)
         + b_ref[...])

    h_new = z[:, :H]                                           # (bb, H)
    logits = z[:, H:]                                          # (bb, O)

    # Numerically stable log-softmax in f32.
    m = jnp.max(logits, axis=-1, keepdims=True)
    shifted = logits - m
    lse = jnp.log(jnp.sum(jnp.exp(shifted), axis=-1, keepdims=True))
    out_ref[0] = (shifted - lse).astype(out_ref.dtype)

    # Carry hidden state to the next timestep (stays in VMEM, never hits HBM).
    h_scr[...] = h_new

    # Write the final hidden state back once, at the last timestep.
    @pl.when(t == T - 1)
    def _():
        hfin_ref[...] = h_new.astype(hfin_ref.dtype)


# ----------------------------------------------------------------------------- wrappers

def rnn_sequence_forward(xs, h0, w_i2h, b_i2h, w_i2o, b_i2o,
                         *, compute_dtype=jnp.bfloat16, batch_block=8):
    """Run the RNN cell over a whole sequence in a single fused Pallas kernel.

    xs:    (T, B, input_size)            float32
    h0:    (B, hidden_size) or (1, hidden_size)
    w_i2h: (input_size+hidden_size, hidden_size), b_i2h: (1, hidden_size)
    w_i2o: (input_size+hidden_size, output_size), b_i2o: (1, output_size)
    returns (outputs (T, B, output_size) log-probs, final hidden (B, hidden_size))
    """
    T, B, I = xs.shape
    H = w_i2h.shape[1]
    O = w_i2o.shape[1]
    N = H + O

    # Fuse the two Linear layers into one weight matrix, then split along the
    # input axis so the kernel never has to concatenate (x, h).
    W = jnp.concatenate([w_i2h, w_i2o], axis=1)                # (I+H, H+O)
    Wx = W[:I, :].astype(compute_dtype)                        # (I, H+O)
    Wh = W[I:, :].astype(compute_dtype)                        # (H, H+O)
    bias = jnp.concatenate([b_i2h, b_i2o], axis=1).astype(jnp.float32)  # (1, H+O)

    # Pad batch to a sublane-friendly multiple of batch_block (>= 8).
    bb = max(8, int(batch_block))
    bb = ((bb + 7) // 8) * 8
    B_pad = ((B + bb - 1) // bb) * bb
    h0 = jnp.broadcast_to(h0.astype(jnp.float32), (B, H))
    if B_pad != B:
        xs = jnp.pad(xs, ((0, 0), (0, B_pad - B), (0, 0)))
        h0 = jnp.pad(h0, ((0, B_pad - B), (0, 0)))
    xs_c = xs.astype(compute_dtype)
    nb = B_pad // bb

    grid = (nb, T)   # batch blocks "parallel" (v7x dual TC), timestep axis "arbitrary"

    out, h_fin = pl.pallas_call(
        _rnn_seq_kernel,
        out_shape=(
            jax.ShapeDtypeStruct((T, B_pad, O), jnp.float32),  # per-step log-probs
            jax.ShapeDtypeStruct((B_pad, H), jnp.float32),     # final hidden
        ),
        grid_spec=pltpu.PrefetchScalarGridSpec(
            num_scalar_prefetch=0,
            grid=grid,
            in_specs=[
                pl.BlockSpec((1, bb, I), lambda b, t: (t, b, 0)),  # x_t tile per step
                pl.BlockSpec((bb, H),    lambda b, t: (b, 0)),     # h0 (once per block)
                pl.BlockSpec((I, N),     lambda b, t: (0, 0)),     # W_x, VMEM-resident
                pl.BlockSpec((H, N),     lambda b, t: (0, 0)),     # W_h, VMEM-resident
                pl.BlockSpec((1, N),     lambda b, t: (0, 0)),     # bias, VMEM-resident
            ],
            out_specs=(
                pl.BlockSpec((1, bb, O), lambda b, t: (t, b, 0)),  # per-step output
                pl.BlockSpec((bb, H),    lambda b, t: (b, 0)),     # final hidden (resident over t)
            ),
            scratch_shapes=[pltpu.VMEM((bb, H), jnp.float32)],     # carried hidden state
        ),
        compiler_params=pltpu.CompilerParams(
            dimension_semantics=("parallel", "arbitrary")),
    )(xs_c, h0, Wx, Wh, bias)

    return out[:, :B, :], h_fin[:B, :]


def rnn_forward(x, h, w_i2h, b_i2h, w_i2o, b_i2o, *, compute_dtype=jnp.float32):
    """Single-step forward matching the PyTorch RNN.forward(input, hidden)."""
    out, h_new = rnn_sequence_forward(x[None], h, w_i2h, b_i2h, w_i2o, b_i2o,
                                      compute_dtype=compute_dtype)
    return out[0], h_new


# ----------------------------------------------------------------------------- params / refs

def init_params(key, input_size, hidden_size, output_size):
    """Deterministic init mimicking nn.Linear defaults (uniform +-1/sqrt(fan_in))."""
    in_features = input_size + hidden_size
    k1, k2, k3, k4 = jax.random.split(key, 4)
    bound = 1.0 / jnp.sqrt(jnp.float32(in_features))
    w_i2h = jax.random.uniform(k1, (in_features, hidden_size),
                               minval=-bound, maxval=bound, dtype=jnp.float32)
    b_i2h = jax.random.uniform(k2, (1, hidden_size),
                               minval=-bound, maxval=bound, dtype=jnp.float32)
    w_i2o = jax.random.uniform(k3, (in_features, output_size),
                               minval=-bound, maxval=bound, dtype=jnp.float32)
    b_i2o = jax.random.uniform(k4, (1, output_size),
                               minval=-bound, maxval=bound, dtype=jnp.float32)
    return w_i2h, b_i2h, w_i2o, b_i2o


def rnn_forward_ref(x, h, w_i2h, b_i2h, w_i2o, b_i2o):
    """Pure-JAX f32 reference of the original PyTorch forward (single step)."""
    combined = jnp.concatenate([x, h], axis=1)
    hid = combined @ w_i2h + b_i2h
    logits = combined @ w_i2o + b_i2o
    out = jax.nn.log_softmax(logits, axis=-1)
    return out, hid


def rnn_sequence_ref(xs, h0, w_i2h, b_i2h, w_i2o, b_i2o, *, compute_dtype=jnp.bfloat16):
    """Pure-JAX reference for the fused sequence kernel (same dtype policy)."""
    H = w_i2h.shape[1]
    W = jnp.concatenate([w_i2h, w_i2o], axis=1).astype(compute_dtype)
    b = jnp.concatenate([b_i2h, b_i2o], axis=1).astype(jnp.float32)

    def step(h, x):
        comb = jnp.concatenate([x.astype(compute_dtype), h.astype(compute_dtype)], axis=1)
        z = jnp.dot(comb, W, preferred_element_type=jnp.float32) + b
        h_new = z[:, :H]
        out = jax.nn.log_softmax(z[:, H:], axis=-1)
        return h_new, out

    h_fin, outs = jax.lax.scan(step, h0.astype(jnp.float32), xs)
    return outs, h_fin


# ----------------------------------------------------------------------------- demo

if __name__ == "__main__":
    input_size, hidden_size, output_size = 16, 32, 8
    batch, seq_len = 2, 8

    key = jax.random.PRNGKey(0)
    kx, kp = jax.random.split(key)
    xs = jax.random.normal(kx, (seq_len, batch, input_size), dtype=jnp.float32)
    h0 = jnp.zeros((batch, hidden_size), dtype=jnp.float32)   # initHidden, broadcast to batch

    w_i2h, b_i2h, w_i2o, b_i2o = init_params(kp, input_size, hidden_size, output_size)

    # 1) Single-step forward (exactly the PyTorch module semantics), f32 math.
    out1, hid1 = rnn_forward(xs[0], h0, w_i2h, b_i2h, w_i2o, b_i2o,
                             compute_dtype=jnp.float32)
    out1 = jax.block_until_ready(out1)
    hid1 = jax.block_until_ready(hid1)
    out1_ref, hid1_ref = rnn_forward_ref(xs[0], h0, w_i2h, b_i2h, w_i2o, b_i2o)
    assert jnp.allclose(out1, out1_ref, atol=1e-4, rtol=1e-4), "single-step output mismatch"
    assert jnp.allclose(hid1, hid1_ref, atol=1e-4, rtol=1e-4), "single-step hidden mismatch"

    # 2) Fused T-step recurrence in one kernel, bf16 MXU path with f32 accumulation.
    outs, h_fin = rnn_sequence_forward(xs, h0, w_i2h, b_i2h, w_i2o, b_i2o,
                                       compute_dtype=jnp.bfloat16)
    outs = jax.block_until_ready(outs)
    h_fin = jax.block_until_ready(h_fin)
    outs_ref, h_fin_ref = rnn_sequence_ref(xs, h0, w_i2h, b_i2h, w_i2o, b_i2o,
                                           compute_dtype=jnp.bfloat16)
    assert jnp.allclose(outs, outs_ref, atol=2e-3, rtol=2e-3), "sequence output mismatch"
    assert jnp.allclose(h_fin, h_fin_ref, atol=2e-3, rtol=2e-3), "sequence hidden mismatch"

    print("KERNEL_OK")
</pallas_src>

<mosaic_0001>
module attributes {stable_mosaic.version = 11 : i64} {
  func.func @_rnn_seq_kernel(%arg0: i32, %arg1: i32, %arg2: memref<1x8x16xf32, #tpu.memory_space<vmem>>, %arg3: memref<8x32xf32, #tpu.memory_space<vmem>>, %arg4: memref<16x40xf32, #tpu.memory_space<vmem>>, %arg5: memref<32x40xf32, #tpu.memory_space<vmem>>, %arg6: memref<1x40xf32, #tpu.memory_space<vmem>>, %arg7: memref<1x8x8xf32, #tpu.memory_space<vmem>>, %arg8: memref<8x32xf32, #tpu.memory_space<vmem>>, %arg9: memref<8x32xf32, #tpu.memory_space<vmem>>) attributes {dimension_semantics = [#tpu.dimension_semantics<parallel>, #tpu.dimension_semantics<arbitrary>], iteration_bounds = array<i64: 1, 1>, scalar_prefetch = 0 : i64, scratch_operands = 1 : i64, tpu.core_type = #tpu.core_type<tc>, window_params = [{transform_indices = @transform_0, window_bounds = array<i64: 1, 8, 16>}, {transform_indices = @transform_1, window_bounds = array<i64: 8, 32>}, {pipeline_mode = #tpu.pipeline_mode<synchronous>, transform_indices = @transform_2, window_bounds = array<i64: 16, 40>}, {pipeline_mode = #tpu.pipeline_mode<synchronous>, transform_indices = @transform_3, window_bounds = array<i64: 32, 40>}, {pipeline_mode = #tpu.pipeline_mode<synchronous>, transform_indices = @transform_4, window_bounds = array<i64: 1, 40>}, {transform_indices = @transform_5, window_bounds = array<i64: 1, 8, 8>}, {transform_indices = @transform_6, window_bounds = array<i64: 8, 32>}]} {
    %c0_i32 = arith.constant 0 : i32
    %0 = arith.cmpi eq, %arg1, %c0_i32 : i32
    %1 = arith.extui %0 : i1 to i32
    %c0_i32_0 = arith.constant 0 : i32
    %2 = arith.cmpi ne, %1, %c0_i32_0 : i32
    scf.if %2 {
      %c0_21 = arith.constant 0 : index
      %c0_22 = arith.constant 0 : index
      %33 = vector.load %arg3[%c0_21, %c0_22] : memref<8x32xf32, #tpu.memory_space<vmem>>, vector<8x32xf32>
      %c0_23 = arith.constant 0 : index
      %c0_24 = arith.constant 0 : index
      %34 = vector.load %arg9[%c0_23, %c0_24] : memref<8x32xf32, #tpu.memory_space<vmem>>, vector<8x32xf32>
      tpu.vector_store %arg9[%c0_23, %c0_24], %33 {strides = array<i32>} : memref<8x32xf32, #tpu.memory_space<vmem>>, vector<8x32xf32>,
    } else {
    }
    %c0 = arith.constant 0 : index
    %c0_1 = arith.constant 0 : index
    %c0_2 = arith.constant 0 : index
    %3 = vector.load %arg2[%c0, %c0_1, %c0_2] : memref<1x8x16xf32, #tpu.memory_space<vmem>>, vector<1x8x16xf32>
    %4 = vector.shape_cast %3 : vector<1x8x16xf32> to vector<8x16xf32>
    %c0_3 = arith.constant 0 : index
    %c0_4 = arith.constant 0 : index
    %5 = vector.load %arg9[%c0_3, %c0_4] : memref<8x32xf32, #tpu.memory_space<vmem>>, vector<8x32xf32>
    %c0_5 = arith.constant 0 : index
    %c0_6 = arith.constant 0 : index
    %6 = vector.load %arg4[%c0_5, %c0_6] : memref<16x40xf32, #tpu.memory_space<vmem>>, vector<16x40xf32>
    %cst = arith.constant dense<0.000000e+00> : vector<8x40xf32>
    %7 = tpu.matmul %4, %6, %cst {dimension_numbers = #tpu.dot_dimension_numbers<[1], [0], [0], [1], [0, 0, 1, 1], [], []>} : vector<8x16xf32>, vector<16x40xf32>, vector<8x40xf32> -> vector<8x40xf32>
    %c0_7 = arith.constant 0 : index
    %c0_8 = arith.constant 0 : index
    %8 = vector.load %arg5[%c0_7, %c0_8] : memref<32x40xf32, #tpu.memory_space<vmem>>, vector<32x40xf32>
    %cst_9 = arith.constant dense<0.000000e+00> : vector<8x40xf32>
    %9 = tpu.matmul %5, %8, %cst_9 {dimension_numbers = #tpu.dot_dimension_numbers<[1], [0], [0], [1], [0, 0, 1, 1], [], []>} : vector<8x32xf32>, vector<32x40xf32>, vector<8x40xf32> -> vector<8x40xf32>
    %10 = arith.addf %7, %9 : vector<8x40xf32>
    %c0_10 = arith.constant 0 : index
    %c0_11 = arith.constant 0 : index
    %11 = vector.load %arg6[%c0_10, %c0_11] : memref<1x40xf32, #tpu.memory_space<vmem>>, vector<1x40xf32>
    %12 = vector.broadcast %11 : vector<1x40xf32> to vector<8x40xf32>
    %13 = arith.addf %10, %12 : vector<8x40xf32>
    %14 = vector.extract_strided_slice %13 {offsets = [0, 0], sizes = [8, 32], strides = [1, 1]} : vector<8x40xf32> to vector<8x32xf32>
    %15 = vector.extract_strided_slice %13 {offsets = [0, 32], sizes = [8, 8], strides = [1, 1]} : vector<8x40xf32> to vector<8x8xf32>
    %cst_12 = arith.constant dense<0xFF800000> : vector<8xf32>
    %16 = vector.multi_reduction <maximumf>, %15, %cst_12 [1] : vector<8x8xf32> to vector<8xf32>
    %17 = vector.shape_cast %16 : vector<8xf32> to vector<8x1xf32>
    %18 = vector.broadcast %17 : vector<8x1xf32> to vector<8x8xf32>
    %19 = arith.subf %15, %18 : vector<8x8xf32>
    %20 = math.exp %19 : vector<8x8xf32>
    %cst_13 = arith.constant dense<0.000000e+00> : vector<8xf32>
    %21 = vector.multi_reduction <add>, %20, %cst_13 [1] : vector<8x8xf32> to vector<8xf32>
    %22 = vector.shape_cast %21 : vector<8xf32> to vector<8x1xf32>
    %23 = math.log %22 : vector<8x1xf32>
    %24 = vector.broadcast %23 : vector<8x1xf32> to vector<8x8xf32>
    %25 = arith.subf %19, %24 : vector<8x8xf32>
    %c0_14 = arith.constant 0 : index
    %c0_15 = arith.constant 0 : index
    %c0_16 = arith.constant 0 : index
    %26 = vector.load %arg7[%c0_14, %c0_15, %c0_16] : memref<1x8x8xf32, #tpu.memory_space<vmem>>, vector<1x8x8xf32>
    %27 = vector.shape_cast %26 : vector<1x8x8xf32> to vector<8x8xf32>
    %28 = vector.shape_cast %25 : vector<8x8xf32> to vector<1x8x8xf32>
    tpu.vector_store %arg7[%c0_14, %c0_15, %c0_16], %28 {strides = array<i32>} : memref<1x8x8xf32, #tpu.memory_space<vmem>>, vector<1x8x8xf32>,
    %c0_17 = arith.constant 0 : index
    %c0_18 = arith.constant 0 : index
    %29 = vector.load %arg9[%c0_17, %c0_18] : memref<8x32xf32, #tpu.memory_space<vmem>>, vector<8x32xf32>
    tpu.vector_store %arg9[%c0_17, %c0_18], %14 {strides = array<i32>} : memref<8x32xf32, #tpu.memory_space<vmem>>, vector<8x32xf32>,
    %c0_i32_19 = arith.constant 0 : i32
    %30 = arith.cmpi eq, %arg1, %c0_i32_19 : i32
    %31 = arith.extui %30 : i1 to i32
    %c0_i32_20 = arith.constant 0 : i32
    %32 = arith.cmpi ne, %31, %c0_i32_20 : i32
    scf.if %32 {
      %c0_21 = arith.constant 0 : index
      %c0_22 = arith.constant 0 : index
      %33 = vector.load %arg8[%c0_21, %c0_22] : memref<8x32xf32, #tpu.memory_space<vmem>>, vector<8x32xf32>
      tpu.vector_store %arg8[%c0_21, %c0_22], %14 {strides = array<i32>} : memref<8x32xf32, #tpu.memory_space<vmem>>, vector<8x32xf32>,
    } else {
    }
    return
  }
  func.func @transform_0(%arg0: i32, %arg1: i32) -> (i32, i32, i32) {
    %c0_i32 = arith.constant 0 : i32
    %c0_i32_0 = arith.constant 0 : i32
    return %arg1, %arg0, %c0_i32 : i32, i32, i32
  }
  func.func @transform_1(%arg0: i32, %arg1: i32) -> (i32, i32) {
    %c0_i32 = arith.constant 0 : i32
    %c0_i32_0 = arith.constant 0 : i32
    return %arg0, %c0_i32 : i32, i32
  }
  func.func @transform_2(%arg0: i32, %arg1: i32) -> (i32, i32) {
    %c0_i32 = arith.constant 0 : i32
    %c0_i32_0 = arith.constant 0 : i32
    %c0_i32_1 = arith.constant 0 : i32
    return %c0_i32, %c0_i32_0 : i32, i32
  }
  func.func @transform_3(%arg0: i32, %arg1: i32) -> (i32, i32) {
    %c0_i32 = arith.constant 0 : i32
    %c0_i32_0 = arith.constant 0 : i32
    %c0_i32_1 = arith.constant 0 : i32
    return %c0_i32, %c0_i32_0 : i32, i32
  }
  func.func @transform_4(%arg0: i32, %arg1: i32) -> (i32, i32) {
    %c0_i32 = arith.constant 0 : i32
    %c0_i32_0 = arith.constant 0 : i32
    %c0_i32_1 = arith.constant 0 : i32
    return %c0_i32, %c0_i32_0 : i32, i32
  }
  func.func @transform_5(%arg0: i32, %arg1: i32) -> (i32, i32, i32) {
    %c0_i32 = arith.constant 0 : i32
    %c0_i32_0 = arith.constant 0 : i32
    return %arg1, %arg0, %c0_i32 : i32, i32, i32
  }
  func.func @transform_6(%arg0: i32, %arg1: i32) -> (i32, i32) {
    %c0_i32 = arith.constant 0 : i32
    %c0_i32_0 = arith.constant 0 : i32
    return %arg0, %c0_i32 : i32, i32
  }
}

</mosaic_0001>

<llo_original>
// kernel: tpu_custom_call.1
$region0: #{tpu_custom_call.1}
  #allocation0 [shape = 'u32[]', space=smem, size = 0x4, offset = 0x4, fixed_abs, tag = 'smem constant byte address 0x4 - core index']
  #allocation1 [shape = 'u32[72,128]{1,0:T(1,128)}', space=vmem, size = 0x9000, scoped, tag = 'internal scratch']
  #allocation2 [shape = 'f32[8,32]{1,0:T(8,128)}', space=vmem, size = 0x1000, scoped, tag = 'scratch operand']
  %s0 = inlined_call_operand.hbm [shape: f32[1,8,16], index: 0, kind: input, shape index: {}]
  %s1 = inlined_call_operand.hbm [shape: f32[8,32], index: 1, kind: input, shape index: {}]
  %s2 = inlined_call_operand.hbm [shape: f32[16,40], index: 2, kind: input, shape index: {}]
  %s3 = inlined_call_operand.hbm [shape: f32[32,40], index: 3, kind: input, shape index: {}]
  %s4 = inlined_call_operand.vmem [shape: f32[1,40], index: 4, kind: input, shape index: {}]
  %s5 = inlined_call_operand.hbm [shape: f32[1,8,8], index: 5, kind: output, shape index: {0}]
  %s6 = inlined_call_operand.hbm [shape: f32[8,32], index: 6, kind: output, shape index: {1}]
  %7 = xla_tuple %s5, %s6
  %s8 = sld [smem:[#allocation0]]
  $region62: #{tpu_custom_call.1} parent=0
    _
  %s10 = ssub.s32 1, %s8
  %s11 = scalar_select 0, %s10, %s8
  $region1: #{tpu_custom_call.1} parent=0
    #allocation3 [shape = 'u8[4096]{0}', space=vmem, size = 0x1000, scoped, tag = 'input window, operand 0, single buffered']
    #allocation4 [shape = 's32[1]{0}', space=sflag, size = 0x4, scoped, tag = 'scoped memory for tpu_custom_call.1']
    #allocation5 [shape = 's32[1]{0}', space=sflag, size = 0x4, scoped, tag = 'scoped memory for tpu_custom_call.1']
    #allocation6 [shape = 'u8[4096]{0}', space=vmem, size = 0x1000, scoped, tag = 'input window, operand 1, single buffered']
    #allocation7 [shape = 's32[1]{0}', space=sflag, size = 0x4, scoped, tag = 'scoped memory for tpu_custom_call.1']
    #allocation8 [shape = 'u8[8192]{0}', space=vmem, size = 0x2000, scoped, tag = 'input window, operand 2, single buffered']
    #allocation9 [shape = 'u8[16384]{0}', space=vmem, size = 0x4000, scoped, tag = 'input window, operand 3, single buffered']
    #allocation10 [shape = 's32[1]{0}', space=sflag, size = 0x4, scoped, tag = 'scoped memory for tpu_custom_call.1']
    #allocation11 [shape = 'u8[4096]{0}', space=vmem, size = 0x1000, scoped, tag = 'output window, operand 0, single buffered']
    #allocation12 [shape = 'u8[4096]{0}', space=vmem, size = 0x1000, scoped, tag = 'output window, operand 1, single buffered']
    #allocation13 [shape = 's32[1]{0}', space=sflag, size = 0x4, scoped, tag = 'scoped memory for tpu_custom_call.1']
    %12 = vsyncpa [#allocation4], 0
    %13 = vsyncpa [#allocation7], 0
    %14 = vsyncpa [#allocation10], 0
    %15 = vsyncpa [#allocation5], 0
    %16 = vsyncpa [#allocation13], 0
    // Predicated region
    $region2: #{tpu_custom_call.1} parent=1 // pred_check
      _
    $region3: #{tpu_custom_call.1} parent=1 // pred_check_branch
      %18 = sbr.rel (0) target = $region5
    $region4: #{tpu_custom_call.1} parent=1 // pred_region
      %20 = vsyncadd [#allocation4], 0
      %s22 = sshll.u32 %s0, 4
      %s23 = int_to_ptr.hbm [resolvable:$true] %s22
      %s24 = sshll.u32 [#allocation3], 4
      %s25 = int_to_ptr.vmem [resolvable:$true] %s24
      %27 = dma.hbm_to_vmem [thread:$0]  %s23, 128, %s25, [#allocation4]
    $region5: #{tpu_custom_call.1} parent=1 // pred_fallthru
      _
    // Predicated region
    $region6: #{tpu_custom_call.1} parent=1 // pred_check
      _
    $region7: #{tpu_custom_call.1} parent=1 // pred_check_branch
      %29 = sbr.rel (0) target = $region9
    $region8: #{tpu_custom_call.1} parent=1 // pred_region
      %31 = vsyncadd [#allocation7], 0
      %s33 = sshll.u32 %s1, 4
      %s34 = int_to_ptr.hbm [resolvable:$true] %s33
      %s35 = sshll.u32 [#allocation6], 4
      %s36 = int_to_ptr.vmem [resolvable:$true] %s35
      %38 = dma.hbm_to_vmem [thread:$0]  %s34, 128, %s36, [#allocation7]
    $region9: #{tpu_custom_call.1} parent=1 // pred_fallthru
      _
    // Predicated region
    $region10: #{tpu_custom_call.1} parent=1 // pred_check
      _
    $region11: #{tpu_custom_call.1} parent=1 // pred_check_branch
      %40 = sbr.rel (0) target = $region13
    $region12: #{tpu_custom_call.1} parent=1 // pred_region
      %42 = vsyncadd [#allocation7], 0
      %s43 = sshll.u32 %s2, 4
      %s44 = int_to_ptr.hbm [resolvable:$true] %s43
      %s45 = sshll.u32 [#allocation8], 4
      %s46 = int_to_ptr.vmem [resolvable:$true] %s45
      %51 = dma.hbm_to_vmem [thread:$0]  %s44, 256, %s46, [#allocation7], 128, 128, 8
    $region13: #{tpu_custom_call.1} parent=1 // pred_fallthru
      _
    // Predicated region
    $region14: #{tpu_custom_call.1} parent=1 // pred_check
      _
    $region15: #{tpu_custom_call.1} parent=1 // pred_check_branch
      %53 = sbr.rel (0) target = $region17
    $region16: #{tpu_custom_call.1} parent=1 // pred_region
      %55 = vsyncadd [#allocation10], 0
      %s56 = sshll.u32 %s3, 4
      %s57 = int_to_ptr.hbm [resolvable:$true] %s56
      %s58 = sshll.u32 [#allocation9], 4
      %s59 = int_to_ptr.vmem [resolvable:$true] %s58
      %64 = dma.hbm_to_vmem [thread:$0]  %s57, 512, %s59, [#allocation10], 128, 128, 8
    $region17: #{tpu_custom_call.1} parent=1 // pred_fallthru
      _
    // Predicated region
    $region18: #{tpu_custom_call.1} parent=1 // pred_check
      _
    $region19: #{tpu_custom_call.1} parent=1 // pred_check_branch
      %66 = sbr.rel (0) target = $region21
    $region20: #{tpu_custom_call.1} parent=1 // pred_region
      _
    $region21: #{tpu_custom_call.1} parent=1 // pred_fallthru
      _
    // Predicated region
    $region22: #{tpu_custom_call.1} parent=1 // pred_check
      _
    $region23: #{tpu_custom_call.1} parent=1 // pred_check_branch
      %68 = sbr.rel (0) target = $region25
    $region24: #{tpu_custom_call.1} parent=1 // pred_region
      %70 = dma.done [#allocation4], 128
    $region25: #{tpu_custom_call.1} parent=1 // pred_fallthru
      _
    // Predicated region
    $region26: #{tpu_custom_call.1} parent=1 // pred_check
      _
    $region27: #{tpu_custom_call.1} parent=1 // pred_check_branch
      %72 = sbr.rel (0) target = $region29
    $region28: #{tpu_custom_call.1} parent=1 // pred_region
      %74 = dma.done [#allocation7], 128
    $region29: #{tpu_custom_call.1} parent=1 // pred_fallthru
      _
    // Predicated region
    $region30: #{tpu_custom_call.1} parent=1 // pred_check
      _
    $region31: #{tpu_custom_call.1} parent=1 // pred_check_branch
      %76 = sbr.rel (0) target = $region33
    $region32: #{tpu_custom_call.1} parent=1 // pred_region
      %78 = dma.done [#allocation7], 256
    $region33: #{tpu_custom_call.1} parent=1 // pred_fallthru
      _
    // Predicated region
    $region34: #{tpu_custom_call.1} parent=1 // pred_check
      _
    $region35: #{tpu_custom_call.1} parent=1 // pred_check_branch
      %80 = sbr.rel (0) target = $region37
    $region36: #{tpu_custom_call.1} parent=1 // pred_region
      %82 = dma.done [#allocation10], 512
    $region37: #{tpu_custom_call.1} parent=1 // pred_fallthru
      _
    %p83 = scmp.eq.s32.totalorder 0, 0
    // Predicated region
    $region38: #{tpu_custom_call.1} parent=1 // pred_check
      %p84 = pneg %p83
    $region39: #{tpu_custom_call.1} parent=1 // pred_check_branch
      %86 = sbr.rel (%p84) target = $region41
    $region40: #{tpu_custom_call.1} parent=1 // pred_region
      %v87 = vld [vmem:[#allocation6] sm:$0xff]
      %vm88 = vcmask 261120
      %89 = vst.msk [vmem:[#allocation2] sm:$0xff] %vm88, %v87
    $region41: #{tpu_custom_call.1} parent=1 // pred_fallthru
      _
    %v90 = vld [vmem:[#allocation3] sm:$0xff]
    %v91 = vld [vmem:[#allocation2] sm:$0xff]
    %v92 = vld [vmem:[#allocation8] sm:$0xff]
    %v93 = vld [vmem:[#allocation8 + $0x8] sm:$0xff]
    %v94 = vld [vmem:[#allocation9] sm:$0xff]
    %v95 = vld [vmem:[#allocation9 + $0x8] sm:$0xff]
    %v96 = vld [vmem:[#allocation9 + $0x10] sm:$0xff]
    %v97 = vld [vmem:[#allocation9 + $0x18] sm:$0xff]
    %vm98 = vcmask 261120
    %v100 = vsel %vm98, %v91, 0
    %102 = vmatpush.msra.mxu0 0.0
    %103 = vmatpush.msra.mxu0 0.0
    %104 = vmatpush.msra.mxu0 0.0
    %105 = vmatpush.msra.mxu0 0.0
    %106 = vmatpush.msra.mxu0 0.0
    %107 = vmatpush.msra.mxu0 0.0
    %108 = vmatpush.msra.mxu0 0.0
    %109 = vmatpush.msra.mxu0 0.0
    %110 = vmatpush.msra.mxu0 0.0
    %111 = vmatpush.msra.mxu0 0.0
    %112 = vmatpush.msra.mxu0 0.0
    %113 = vmatpush.msra.mxu0 0.0
    %114 = vmatpush.msra.mxu0 %v97
    %115 = vmatpush.msra.mxu0 %v96
    %116 = vmatpush.msra.mxu0 %v95
    %117 = vmatpush.msra.mxu0 %v94
    %118 = vmatmul.f32.gmra.mxu0 %v100
    %v119 = vpop.f32.mrf.mxu0
    %v120 = vadd.f32 0.0, %v119
    %121 = vdwg.mxu0
    %vm122 = vcmask 130048
    %v124 = vsel %vm122, %v90, 0
    %126 = vmatpush.msra.mxu0 0.0
    %127 = vmatpush.msra.mxu0 0.0
    %128 = vmatpush.msra.mxu0 0.0
    %129 = vmatpush.msra.mxu0 0.0
    %130 = vmatpush.msra.mxu0 0.0
    %131 = vmatpush.msra.mxu0 0.0
    %132 = vmatpush.msra.mxu0 0.0
    %133 = vmatpush.msra.mxu0 0.0
    %134 = vmatpush.msra.mxu0 0.0
    %135 = vmatpush.msra.mxu0 0.0
    %136 = vmatpush.msra.mxu0 0.0
    %137 = vmatpush.msra.mxu0 0.0
    %138 = vmatpush.msra.mxu0 0.0
    %139 = vmatpush.msra.mxu0 0.0
    %140 = vmatpush.msra.mxu0 %v93
    %141 = vmatpush.msra.mxu0 %v92
    %142 = vmatmul.f32.gmra.mxu0 %v124
    %v143 = vpop.f32.mrf.mxu0
    %v144 = vadd.f32 %v120, %v143
    %145 = vdwg.mxu0
    %v146 = vld [vmem:[%s4] sm:$0x1]
    %v148 = vperm.slane %v146, 0
    %v150 = vadd.f32 %v144, %v148
    %vm151 = vcmask 326912
    %v152 = vsel %vm151, %v150, -inf
    %153 = vmax.xlane.f32.xlu0 %v152
    %v154 = vpop.xlane.xlu0 %153
    %v155 = vsub.f32 %v150, %v154
    %v156 = vmul.f32 %v155, 1.442695
    %v157 = vpow.pop %v156
    %159 = vrot.lane.b32.xlu0 %v157, 96
    %v160 = vpop.permute.xlu0 %159
    %vm162 = vcmask 64512
    %v163 = vsel %vm162, %v160, 0.0
    %164 = vadd.xlane.f32.xlu0 %v163
    %v165 = vpop.xlane.xlu0 %164
    %v166 = vlog2.pop %v165
    %v167 = vmul.f32 %v166, 0.6931472
    %v168 = vsub.f32 %v155, %v167
    %170 = vrot.lane.b32.xlu0 %v168, 96
    %v171 = vpop.permute.xlu0 %170
    %173 = vst.msk [vmem:[#allocation11] sm:$0xff] %vm162, %v171
    %174 = vst.msk [vmem:[#allocation2] sm:$0xff] %vm98, %v150
    // Predicated region
    $region42: #{tpu_custom_call.1} parent=1 // pred_check
      %p175 = pneg %p83
    $region43: #{tpu_custom_call.1} parent=1 // pred_check_branch
      %177 = sbr.rel (%p175) target = $region45
    $region44: #{tpu_custom_call.1} parent=1 // pred_region
      %178 = vst.msk [vmem:[#allocation12] sm:$0xff] %vm98, %v150
    $region45: #{tpu_custom_call.1} parent=1 // pred_fallthru
      _
    // Predicated region
    $region46: #{tpu_custom_call.1} parent=1 // pred_check
      _
    $region47: #{tpu_custom_call.1} parent=1 // pred_check_branch
      %180 = sbr.rel (0) target = $region49
    $region48: #{tpu_custom_call.1} parent=1 // pred_region
      %182 = vsyncadd [#allocation5], 0
      %s184 = sshll.u32 [#allocation11], 4
      %s185 = int_to_ptr.vmem [resolvable:$true] %s184
      %s186 = sshll.u32 %s5, 4
      %s187 = int_to_ptr.hbm [resolvable:$true] %s186
      %189 = dma.vmem_to_hbm [thread:$0]  %s185, 128, %s187, [#allocation5]
    $region49: #{tpu_custom_call.1} parent=1 // pred_fallthru
      _
    // Predicated region
    $region50: #{tpu_custom_call.1} parent=1 // pred_check
      _
    $region51: #{tpu_custom_call.1} parent=1 // pred_check_branch
      %191 = sbr.rel (0) target = $region53
    $region52: #{tpu_custom_call.1} parent=1 // pred_region
      %193 = vsyncadd [#allocation13], 0
      %s195 = sshll.u32 [#allocation12], 4
      %s196 = int_to_ptr.vmem [resolvable:$true] %s195
      %s197 = sshll.u32 %s6, 4
      %s198 = int_to_ptr.hbm [resolvable:$true] %s197
      %200 = dma.vmem_to_hbm [thread:$0]  %s196, 128, %s198, [#allocation13]
    $region53: #{tpu_custom_call.1} parent=1 // pred_fallthru
      _
    // Predicated region
    $region54: #{tpu_custom_call.1} parent=1 // pred_check
      _
    $region55: #{tpu_custom_call.1} parent=1 // pred_check_branch
      %202 = sbr.rel (0) target = $region57
    $region56: #{tpu_custom_call.1} parent=1 // pred_region
      %204 = dma.done [#allocation5], 128
    $region57: #{tpu_custom_call.1} parent=1 // pred_fallthru
      _
    // Predicated region
    $region58: #{tpu_custom_call.1} parent=1 // pred_check
      _
    $region59: #{tpu_custom_call.1} parent=1 // pred_check_branch
      %206 = sbr.rel (0) target = $region61
    $region60: #{tpu_custom_call.1} parent=1 // pred_region
      %208 = dma.done [#allocation13], 128
    $region61: #{tpu_custom_call.1} parent=1 // pred_fallthru
      _
    %209 = vsyncpa [#allocation4], 1
    %210 = vsyncpa [#allocation7], 1
    %211 = vsyncpa [#allocation10], 1
    %212 = vsyncpa [#allocation5], 1
    %213 = vsyncpa [#allocation13], 1

</llo_original>
